<compile_context>
chip_gen: v7x
topology: tpu7x:2x2x1
jax: 0.10.0
libtpu: 0.0.40
codegen_flags: <defaults>
</compile_context>

<pallas_src>
import functools

import jax
import jax.numpy as jnp
from jax import lax
from jax.experimental import pallas as pl
from jax.experimental.pallas import tpu as pltpu

_NEG_LARGE = -1e30  # bias for padded classes -> softmax prob exactly 0


# ---------------------------------------------------------------------------
# Kernels
# ---------------------------------------------------------------------------

def _matmul_bias(x_ref, w_ref, b_ref):
    """(TILE_M, D) @ (D, TILE_N) + (1, TILE_N), f32 accumulation on the MXU."""
    logits = lax.dot_general(
        x_ref[...], w_ref[...],
        dimension_numbers=(((1,), (0,)), ((), ())),   # natural (M,K) x (K,N)
        preferred_element_type=jnp.float32,
    )
    return logits + b_ref[...]


def _resident_head_kernel(x_ref, w_ref, b_ref, o_ref, *, training, bf16_exp):
    """Whole class dim resident in VMEM: logits (+ softmax) in one fused pass."""
    logits = _matmul_bias(x_ref, w_ref, b_ref)
    if training:
        o_ref[...] = logits.astype(o_ref.dtype)
    else:
        m = jnp.max(logits, axis=-1, keepdims=True)
        z = logits - m
        if bf16_exp:
            # v6e/v7x only (bf16 EUP ~2x exp throughput for very wide heads).
            e = jnp.exp(z.astype(jnp.bfloat16)).astype(jnp.float32)
        else:
            e = jnp.exp(z)
        denom = jnp.sum(e, axis=-1, keepdims=True)
        r = pl.reciprocal(denom, approx=True)          # EUP vrcp (cheap)
        r = r * (2.0 - denom * r)                      # one Newton step -> ~f32 exact
        o_ref[...] = (e * r).astype(o_ref.dtype)


def _logits_tile_kernel(x_ref, w_ref, b_ref, o_ref):
    """Class-tiled training path: raw logits for one (row, class) tile."""
    o_ref[...] = _matmul_bias(x_ref, w_ref, b_ref).astype(o_ref.dtype)


def _logits_stats_tile_kernel(x_ref, w_ref, b_ref, lg_ref, m_ref, l_ref):
    """Class-tiled eval pass A: raw logits + online row max / exp-sum.

    m_ref / l_ref are (TILE_M, 1) output blocks whose block index is constant
    along the class grid axis ("arbitrary"), so they stay resident in VMEM and
    act as flash-style accumulators.
    """
    j = pl.program_id(1)
    logits = _matmul_bias(x_ref, w_ref, b_ref)
    lg_ref[...] = logits

    blk_max = jnp.max(logits, axis=-1, keepdims=True)

    @pl.when(j == 0)
    def _init():
        m_ref[...] = blk_max
        l_ref[...] = jnp.sum(jnp.exp(logits - blk_max), axis=-1, keepdims=True)

    @pl.when(j > 0)
    def _update():
        m_prev = m_ref[...]
        m_new = jnp.maximum(m_prev, blk_max)
        l_ref[...] = (l_ref[...] * jnp.exp(m_prev - m_new)
                      + jnp.sum(jnp.exp(logits - m_new), axis=-1, keepdims=True))
        m_ref[...] = m_new


def _normalize_kernel(lg_ref, m_ref, l_ref, o_ref):
    """Class-tiled eval pass B: probs = exp(logits - m) / l."""
    e = jnp.exp(lg_ref[...] - m_ref[...])
    l = l_ref[...]
    r = pl.reciprocal(l, approx=True)
    r = r * (2.0 - l * r)
    o_ref[...] = (e * r).astype(o_ref.dtype)


# ---------------------------------------------------------------------------
# Wrapper helpers
# ---------------------------------------------------------------------------

def _round_up(v: int, m: int) -> int:
    return ((v + m - 1) // m) * m


def _cdiv(a: int, b: int) -> int:
    return (a + b - 1) // b


def _chip_info():
    """Returns (is_v5e, tile budget bytes, vmem_limit_bytes for CompilerParams)."""
    kind = ""
    try:
        kind = jax.devices()[0].device_kind.lower()
    except Exception:
        pass
    is_v5e = ("v5 lite" in kind) or ("v5e" in kind) or ("v5litepod" in kind)
    cap = 0
    try:
        cap = int(getattr(pltpu.get_tpu_info(), "vmem_capacity_bytes", 0))
    except Exception:
        cap = 0
    if cap <= 0:
        cap = (64 << 20) if "7" in kind else (128 << 20)   # v7x has 64 MiB / TC
    vmem_limit = cap * 3 // 4               # ~96 MiB v5e/v6e, ~48 MiB v7x
    budget = vmem_limit - (4 << 20)         # headroom for Mosaic internal scratch
    return is_v5e, budget, int(vmem_limit)


def _choose_resident_tile_m(m_rows, d, c_pad, out_bytes, budget, is_v5e):
    """Row-tile size for the resident-weight path, or None if W does not fit."""
    fixed = 2 * (c_pad * d * 2) + 2 * (8 * c_pad * 4)       # dbuf bf16 W + padded bias
    per_row = (2 * d * 2                                    # dbuf bf16 x row
               + 2 * c_pad * out_bytes                      # dbuf output row
               + 2 * c_pad * 4)                             # in-kernel f32 temporaries
    avail = budget - fixed
    if avail < 16 * per_row:
        return None                                         # -> class-tiled fallback
    tile = avail // per_row
    tile = min(tile, 512 if is_v5e else 1024)               # HBM-roofline plateau
    if m_rows >= 512:
        # Keep >= 2 row tiles so megacore / v7x's two TensorCores both get work.
        tile = min(tile, _round_up(_cdiv(m_rows, 2), 256))
    tile = min(tile, _round_up(m_rows, 16))
    if tile >= 512 and not is_v5e:
        tile = (tile // 256) * 256                          # 2x256x256 MXU-friendly
    elif tile >= 256:
        tile = (tile // 128) * 128
    else:
        tile = max(16, (tile // 16) * 16)                   # bf16 sublane packing
    return tile


def _choose_class_tiles(m_rows, d, c_pad, out_bytes, budget):
    """(TILE_M, TILE_N) for the class-tiled fallback path."""
    def usage(tm, tn):
        return (2 * tm * d * 2              # dbuf bf16 x block
                + 2 * d * tn * 2            # dbuf bf16 W block
                + 2 * 8 * tn * 4            # dbuf padded bias block
                + 2 * tm * tn * 4           # dbuf f32 logits block
                + 2 * tm * tn * 4           # in-kernel f32 temporaries
                + 4 * 2 * tm * 4            # resident m/l blocks
                + 2 * tm * tn * max(out_bytes, 4))   # normalize-pass blocks
    tile_n = 2048
    while tile_n > 128 and tile_n > c_pad:
        tile_n //= 2
    tile_m = min(512, _round_up(m_rows, 16))
    while usage(tile_m, tile_n) > budget and tile_n > 128:
        tile_n //= 2
    while usage(tile_m, tile_n) > budget and tile_m > 16:
        tile_m = max(16, (tile_m // 2 // 16) * 16)
    if usage(tile_m, tile_n) > budget:
        raise ValueError(
            "TextRecognitionHead does not fit in VMEM even with class tiling: "
            f"D={d}, C_pad={c_pad}, budget={budget} bytes")
    return tile_m, tile_n


# ---------------------------------------------------------------------------
# Public entry point
# ---------------------------------------------------------------------------

@functools.partial(
    jax.jit,
    static_argnames=("training", "out_dtype", "force_class_tiling",
                     "max_tile_m", "max_tile_n"))
def text_recognition_head(x, weight, bias, *, training=False,
                          out_dtype=jnp.float32,
                          force_class_tiling=False,
                          max_tile_m=None, max_tile_n=None):
    """x: (B, T, D); weight: (C, D); bias: (C,).  Returns (B, T, C).

    force_class_tiling / max_tile_* only exist to exercise the large-head
    fallback path at small test shapes.
    """
    B, T, D = x.shape
    C = weight.shape[0]
    M = B * T
    out_dtype = jnp.dtype(out_dtype)
    out_bytes = out_dtype.itemsize

    is_v5e, budget, vmem_limit = _chip_info()

    # Lane padding of the class dim: 256-multiples feed the 256x256 MXUs of
    # v6e/v7x better; 128 is enough on v5e's 128-wide MXU and for tiny heads.
    lane_mult = 256 if (not is_v5e and C > 128) else 128
    c_pad = _round_up(C, lane_mult)

    tile_m = None if force_class_tiling else _choose_resident_tile_m(
        M, D, c_pad, out_bytes, budget, is_v5e)

    # bf16 MXU inputs (half the DMA bytes); f32 accumulation / bias / softmax.
    x2 = x.reshape(M, D).astype(jnp.bfloat16)
    compiler_kwargs = dict(vmem_limit_bytes=vmem_limit)

    if tile_m is not None:
        # ------------------ resident-weight path (one fused pass) ----------
        if max_tile_m is not None:
            tile_m = min(tile_m, max_tile_m)
        tile_m = max(16, (tile_m // 16) * 16)
        m_pad = _round_up(M, tile_m)
        grid_m = m_pad // tile_m
        if m_pad != M:
            x2 = jnp.pad(x2, ((0, m_pad - M), (0, 0)))

        # NOTE: in a real model the padded / pre-transposed bf16 weight and
        # the masked bias are prepared once at init time and cached; done per
        # call only so this script stays self-contained.
        w2 = jnp.pad(weight, ((0, c_pad - C), (0, 0))).astype(jnp.bfloat16).T  # (D, c_pad)
        b2 = jnp.pad(bias.astype(jnp.float32), ((0, c_pad - C),),
                     constant_values=_NEG_LARGE).reshape(1, c_pad)

        bf16_exp = (not is_v5e) and (not training) and c_pad >= 2048
        kernel = functools.partial(_resident_head_kernel,
                                   training=training, bf16_exp=bf16_exp)
        cost = pl.CostEstimate(
            flops=2 * m_pad * D * c_pad,
            transcendentals=0 if training else m_pad * c_pad,
            bytes_accessed=(m_pad * D * 2 + c_pad * D * 2 + c_pad * 4
                            + m_pad * c_pad * out_bytes))
        out = pl.pallas_call(
            kernel,
            out_shape=jax.ShapeDtypeStruct((m_pad, c_pad), out_dtype),
            grid_spec=pltpu.PrefetchScalarGridSpec(
                num_scalar_prefetch=0,
                grid=(grid_m,),
                in_specs=[
                    pl.BlockSpec((tile_m, D), lambda i: (i, 0)),   # x: tiled rows
                    pl.BlockSpec((D, c_pad), lambda i: (0, 0)),    # W: resident
                    pl.BlockSpec((1, c_pad), lambda i: (0, 0)),    # bias: resident
                ],
                out_specs=pl.BlockSpec((tile_m, c_pad), lambda i: (i, 0)),
            ),
            compiler_params=pltpu.CompilerParams(
                dimension_semantics=("parallel",), **compiler_kwargs),
            cost_estimate=cost,
        )(x2, w2, b2)
    else:
        # ------------------ class-tiled fallback (huge heads) --------------
        tile_m, tile_n = _choose_class_tiles(M, D, c_pad, out_bytes, budget)
        if max_tile_m is not None:
            tile_m = min(tile_m, max_tile_m)
        if max_tile_n is not None:
            tile_n = min(tile_n, max_tile_n)
        tile_m = max(16, (tile_m // 16) * 16)
        tile_n = max(128, (tile_n // 128) * 128)
        c_pad = _round_up(c_pad, tile_n)
        m_pad = _round_up(M, tile_m)
        grid_m = m_pad // tile_m
        grid_n = c_pad // tile_n
        if m_pad != M:
            x2 = jnp.pad(x2, ((0, m_pad - M), (0, 0)))

        w2 = jnp.pad(weight, ((0, c_pad - C), (0, 0))).astype(jnp.bfloat16).T
        b2 = jnp.pad(bias.astype(jnp.float32), ((0, c_pad - C),),
                     constant_values=_NEG_LARGE).reshape(1, c_pad)

        x_spec = pl.BlockSpec((tile_m, D), lambda i, j: (i, 0))
        w_spec = pl.BlockSpec((D, tile_n), lambda i, j: (0, j))
        b_spec = pl.BlockSpec((1, tile_n), lambda i, j: (0, j))
        lg_spec = pl.BlockSpec((tile_m, tile_n), lambda i, j: (i, j))
        stat_spec = pl.BlockSpec((tile_m, 1), lambda i, j: (i, 0))

        flops = 2 * m_pad * D * c_pad
        if training:
            out = pl.pallas_call(
                _logits_tile_kernel,
                out_shape=jax.ShapeDtypeStruct((m_pad, c_pad), out_dtype),
                grid_spec=pltpu.PrefetchScalarGridSpec(
                    num_scalar_prefetch=0,
                    grid=(grid_m, grid_n),
                    in_specs=[x_spec, w_spec, b_spec],
                    out_specs=lg_spec,
                ),
                compiler_params=pltpu.CompilerParams(
                    dimension_semantics=("parallel", "parallel"),
                    **compiler_kwargs),
                cost_estimate=pl.CostEstimate(
                    flops=flops, transcendentals=0,
                    bytes_accessed=(grid_n * m_pad * D * 2 + c_pad * D * 2
                                    + m_pad * c_pad * out_bytes)),
            )(x2, w2, b2)
        else:
            # Pass A: raw logits + online row max / exp-sum (flash-style).
            logits, m_stat, l_stat = pl.pallas_call(
                _logits_stats_tile_kernel,
                out_shape=(
                    jax.ShapeDtypeStruct((m_pad, c_pad), jnp.float32),
                    jax.ShapeDtypeStruct((m_pad, 1), jnp.float32),
                    jax.ShapeDtypeStruct((m_pad, 1), jnp.float32),
                ),
                grid_spec=pltpu.PrefetchScalarGridSpec(
                    num_scalar_prefetch=0,
                    grid=(grid_m, grid_n),
                    in_specs=[x_spec, w_spec, b_spec],
                    out_specs=[lg_spec, stat_spec, stat_spec],
                ),
                compiler_params=pltpu.CompilerParams(
                    dimension_semantics=("parallel", "arbitrary"),
                    **compiler_kwargs),
                cost_estimate=pl.CostEstimate(
                    flops=flops, transcendentals=m_pad * c_pad,
                    bytes_accessed=(grid_n * m_pad * D * 2 + c_pad * D * 2
                                    + m_pad * c_pad * 4)),
            )(x2, w2, b2)
            # Pass B: probs = exp(logits - m) / l.
            out = pl.pallas_call(
                _normalize_kernel,
                out_shape=jax.ShapeDtypeStruct((m_pad, c_pad), out_dtype),
                grid_spec=pltpu.PrefetchScalarGridSpec(
                    num_scalar_prefetch=0,
                    grid=(grid_m, grid_n),
                    in_specs=[lg_spec, stat_spec, stat_spec],
                    out_specs=lg_spec,
                ),
                compiler_params=pltpu.CompilerParams(
                    dimension_semantics=("parallel", "parallel"),
                    **compiler_kwargs),
                cost_estimate=pl.CostEstimate(
                    flops=2 * m_pad * c_pad, transcendentals=m_pad * c_pad,
                    bytes_accessed=m_pad * c_pad * (4 + out_bytes)),
            )(logits, m_stat, l_stat)

    if m_pad != M or c_pad != C:
        # TODO(synk): in a full model keep the padded (m_pad, c_pad) layout
        # downstream to skip this extra HBM pass; the slice only exists to
        # match the module's exact (B, T, C) output contract.
        out = out[:M, :C]
    return out.reshape(B, T, C)


# ---------------------------------------------------------------------------
# Reference & self-test
# ---------------------------------------------------------------------------

def _reference(x, weight, bias, training=False):
    logits = jnp.einsum("btd,cd->btc", x, weight,
                        preferred_element_type=jnp.float32) + bias
    return logits if training else jax.nn.softmax(logits, axis=-1)


if __name__ == "__main__":
    def make_inputs(key, B, T, D, C):
        kx, kw, kb = jax.random.split(key, 3)
        x = jax.random.normal(kx, (B, T, D), dtype=jnp.float32)
        bound = 1.0 / float(D) ** 0.5      # mimic nn.Linear's uniform init scale
        weight = jax.random.uniform(kw, (C, D), jnp.float32, -bound, bound)
        bias = jax.random.uniform(kb, (C,), jnp.float32, -bound, bound)
        return x, weight, bias

    def check(out, x, weight, bias, training, tag):
        x_bf = x.astype(jnp.bfloat16).astype(jnp.float32)
        w_bf = weight.astype(jnp.bfloat16).astype(jnp.float32)
        ref = _reference(x_bf, w_bf, bias, training=training)
        assert out.shape == ref.shape, tag
        assert bool(jnp.all(jnp.isfinite(out))), tag
        tol = 5e-4 if training else 2e-4
        assert jnp.allclose(out, ref, atol=tol, rtol=1e-3), f"{tag}: mismatch"

    # --- 1) resident-weight path (module-default sized shapes) -------------
    B, T, D, C = 2, 8, 32, 16
    x, weight, bias = make_inputs(jax.random.PRNGKey(0), B, T, D, C)

    out_eval = jax.block_until_ready(
        text_recognition_head(x, weight, bias, training=False))
    check(out_eval, x, weight, bias, False, "resident eval")
    # loose sanity check vs full-f32 math (bf16 MXU inputs ~0.4% rel err)
    ref_f32 = _reference(x, weight, bias, training=False)
    assert jnp.allclose(out_eval, ref_f32, atol=1e-2, rtol=1e-2)

    out_train = jax.block_until_ready(
        text_recognition_head(x, weight, bias, training=True))
    check(out_train, x, weight, bias, True, "resident train")

    # --- 2) class-tiled fallback (forced tiny tiles so the online-softmax
    #        accumulation runs across >1 class tile and >1 row tile) --------
    B2, T2, D2, C2 = 2, 40, 32, 200
    x2, weight2, bias2 = make_inputs(jax.random.PRNGKey(1), B2, T2, D2, C2)

    out2_eval = jax.block_until_ready(text_recognition_head(
        x2, weight2, bias2, training=False,
        force_class_tiling=True, max_tile_m=16, max_tile_n=128))
    check(out2_eval, x2, weight2, bias2, False, "class-tiled eval")

    out2_train = jax.block_until_ready(text_recognition_head(
        x2, weight2, bias2, training=True,
        force_class_tiling=True, max_tile_m=16, max_tile_n=128))
    check(out2_train, x2, weight2, bias2, True, "class-tiled train")

    # TODO(synk): post_processing's .cpu().detach() is a host transfer /
    # autograd detail, not a kernel op; it is intentionally not replicated.
    print("KERNEL_OK")
</pallas_src>

<mosaic_0001>
module attributes {stable_mosaic.version = 11 : i64} {
  func.func @_resident_head_kernel(%arg0: i32, %arg1: memref<16x32xbf16, #tpu.memory_space<vmem>>, %arg2: memref<32x128xbf16, #tpu.memory_space<vmem>>, %arg3: memref<1x128xf32, #tpu.memory_space<vmem>>, %arg4: memref<16x128xf32, #tpu.memory_space<vmem>>) attributes {dimension_semantics = [#tpu.dimension_semantics<parallel>], iteration_bounds = array<i64: 1>, scalar_prefetch = 0 : i64, scratch_operands = 0 : i64, tpu.core_type = #tpu.core_type<tc>, window_params = [{transform_indices = @transform_0, window_bounds = array<i64: 16, 32>}, {pipeline_mode = #tpu.pipeline_mode<synchronous>, transform_indices = @transform_1, window_bounds = array<i64: 32, 128>}, {pipeline_mode = #tpu.pipeline_mode<synchronous>, transform_indices = @transform_2, window_bounds = array<i64: 1, 128>}, {transform_indices = @transform_3, window_bounds = array<i64: 16, 128>}]} {
    %c0 = arith.constant 0 : index
    %c0_0 = arith.constant 0 : index
    %0 = vector.load %arg1[%c0, %c0_0] : memref<16x32xbf16, #tpu.memory_space<vmem>>, vector<16x32xbf16>
    %c0_1 = arith.constant 0 : index
    %c0_2 = arith.constant 0 : index
    %1 = vector.load %arg2[%c0_1, %c0_2] : memref<32x128xbf16, #tpu.memory_space<vmem>>, vector<32x128xbf16>
    %cst = arith.constant dense<0.000000e+00> : vector<16x128xf32>
    %2 = tpu.matmul %0, %1, %cst {dimension_numbers = #tpu.dot_dimension_numbers<[1], [0], [0], [1], [0, 0, 1, 1], [], []>} : vector<16x32xbf16>, vector<32x128xbf16>, vector<16x128xf32> -> vector<16x128xf32>
    %c0_3 = arith.constant 0 : index
    %c0_4 = arith.constant 0 : index
    %3 = vector.load %arg3[%c0_3, %c0_4] : memref<1x128xf32, #tpu.memory_space<vmem>>, vector<1x128xf32>
    %4 = vector.broadcast %3 : vector<1x128xf32> to vector<16x128xf32>
    %5 = arith.addf %2, %4 : vector<16x128xf32>
    %cst_5 = arith.constant dense<0xFF800000> : vector<16xf32>
    %6 = vector.multi_reduction <maximumf>, %5, %cst_5 [1] : vector<16x128xf32> to vector<16xf32>
    %7 = vector.shape_cast %6 : vector<16xf32> to vector<16x1xf32>
    %8 = vector.broadcast %7 : vector<16x1xf32> to vector<16x128xf32>
    %9 = arith.subf %5, %8 : vector<16x128xf32>
    %10 = math.exp %9 : vector<16x128xf32>
    %cst_6 = arith.constant dense<0.000000e+00> : vector<16xf32>
    %11 = vector.multi_reduction <add>, %10, %cst_6 [1] : vector<16x128xf32> to vector<16xf32>
    %12 = vector.shape_cast %11 : vector<16xf32> to vector<16x1xf32>
    %13 = tpu.reciprocal %12 {approx = true} : vector<16x1xf32> -> vector<16x1xf32>
    %14 = arith.mulf %12, %13 : vector<16x1xf32>
    %cst_7 = arith.constant 2.000000e+00 : f32
    %15 = vector.broadcast %cst_7 : f32 to vector<16x1xf32>
    %16 = arith.subf %15, %14 : vector<16x1xf32>
    %17 = arith.mulf %13, %16 : vector<16x1xf32>
    %18 = vector.broadcast %17 : vector<16x1xf32> to vector<16x128xf32>
    %19 = arith.mulf %10, %18 : vector<16x128xf32>
    %c0_8 = arith.constant 0 : index
    %c0_9 = arith.constant 0 : index
    %20 = vector.load %arg4[%c0_8, %c0_9] : memref<16x128xf32, #tpu.memory_space<vmem>>, vector<16x128xf32>
    tpu.vector_store %arg4[%c0_8, %c0_9], %19 {strides = array<i32>} : memref<16x128xf32, #tpu.memory_space<vmem>>, vector<16x128xf32>,
    return
  }
  func.func @transform_0(%arg0: i32) -> (i32, i32) {
    %c0_i32 = arith.constant 0 : i32
    %c0_i32_0 = arith.constant 0 : i32
    return %arg0, %c0_i32 : i32, i32
  }
  func.func @transform_1(%arg0: i32) -> (i32, i32) {
    %c0_i32 = arith.constant 0 : i32
    %c0_i32_0 = arith.constant 0 : i32
    %c0_i32_1 = arith.constant 0 : i32
    return %c0_i32, %c0_i32_0 : i32, i32
  }
  func.func @transform_2(%arg0: i32) -> (i32, i32) {
    %c0_i32 = arith.constant 0 : i32
    %c0_i32_0 = arith.constant 0 : i32
    %c0_i32_1 = arith.constant 0 : i32
    return %c0_i32, %c0_i32_0 : i32, i32
  }
  func.func @transform_3(%arg0: i32) -> (i32, i32) {
    %c0_i32 = arith.constant 0 : i32
    %c0_i32_0 = arith.constant 0 : i32
    return %arg0, %c0_i32 : i32, i32
  }
}

</mosaic_0001>

<llo_original>
// kernel: text_recognition_head.1
$region0: #{text_recognition_head.1}
  #allocation0 [shape = 'u32[]', space=smem, size = 0x4, offset = 0x4, fixed_abs, tag = 'smem constant byte address 0x4 - core index']
  #allocation1 [shape = 'u32[144,128]{1,0:T(1,128)}', space=vmem, size = 0x12000, scoped, tag = 'internal scratch']
  %s0 = inlined_call_operand.hbm [shape: bf16[16,32], index: 0, kind: input, shape index: {}]
  %s1 = inlined_call_operand.hbm [shape: bf16[32,128], index: 1, kind: input, shape index: {}]
  %s2 = inlined_call_operand.hbm [shape: f32[1,128], index: 2, kind: input, shape index: {}]
  %s3 = inlined_call_operand.hbm [shape: f32[16,128], index: 3, kind: output, shape index: {}]
  %s4 = sld [smem:[#allocation0]]
  $region34: #{text_recognition_head.1} parent=0
    _
  %s6 = ssub.s32 1, %s4
  %s7 = scalar_select 0, %s6, %s4
  $region1: #{text_recognition_head.1} parent=0
    #allocation2 [shape = 'u8[4096]{0}', space=vmem, size = 0x1000, scoped, tag = 'input window, operand 0, single buffered']
    #allocation3 [shape = 's32[1]{0}', space=sflag, size = 0x4, scoped, tag = 'scoped memory for text_recognition_head.1']
    #allocation4 [shape = 's32[1]{0}', space=sflag, size = 0x4, scoped, tag = 'scoped memory for text_recognition_head.1']
    #allocation5 [shape = 'u8[8192]{0}', space=vmem, size = 0x2000, scoped, tag = 'input window, operand 1, single buffered']
    #allocation6 [shape = 's32[1]{0}', space=sflag, size = 0x4, scoped, tag = 'scoped memory for text_recognition_head.1']
    #allocation7 [shape = 'u8[512]{0}', space=vmem, size = 0x400, scoped, tag = 'input window, operand 2, single buffered']
    #allocation8 [shape = 'u8[8192]{0}', space=vmem, size = 0x2000, scoped, tag = 'output window, operand 0, single buffered']
    %8 = vsyncpa [#allocation3], 0
    %9 = vsyncpa [#allocation6], 0
    %10 = vsyncpa [#allocation4], 0
    // Predicated region
    $region2: #{text_recognition_head.1} parent=1 // pred_check
      _
    $region3: #{text_recognition_head.1} parent=1 // pred_check_branch
      %12 = sbr.rel (0) target = $region5
    $region4: #{text_recognition_head.1} parent=1 // pred_region
      %s14 = ssub.s32 128, 128
      %15 = vsyncadd [#allocation3], %s14
      %s16 = sshll.u32 [#allocation2], 4
      %s17 = int_to_ptr.vmem [resolvable:$true] %s16
      %22 = dma.hbm_to_vmem [thread:$0]  %s0, 128, %s17, [#allocation3], 64, 64, 4
    $region5: #{text_recognition_head.1} parent=1 // pred_fallthru
      _
    // Predicated region
    $region6: #{text_recognition_head.1} parent=1 // pred_check
      _
    $region7: #{text_recognition_head.1} parent=1 // pred_check_branch
      %24 = sbr.rel (0) target = $region9
    $region8: #{text_recognition_head.1} parent=1 // pred_region
      %s26 = ssub.s32 256, 256
      %27 = vsyncadd [#allocation6], %s26
      %s28 = sshll.u32 [#allocation5], 4
      %s29 = int_to_ptr.vmem [resolvable:$true] %s28
      %34 = dma.hbm_to_vmem [thread:$0]  %s1, 256, %s29, [#allocation6], 64, 64, 4
    $region9: #{text_recognition_head.1} parent=1 // pred_fallthru
      _
    // Predicated region
    $region10: #{text_recognition_head.1} parent=1 // pred_check
      _
    $region11: #{text_recognition_head.1} parent=1 // pred_check_branch
      %36 = sbr.rel (0) target = $region13
    $region12: #{text_recognition_head.1} parent=1 // pred_region
      %s38 = ssub.s32 16, 16
      %39 = vsyncadd [#allocation6], %s38
      %s41 = sshll.u32 [#allocation7], 4
      %s42 = int_to_ptr.vmem [resolvable:$true] %s41
      %44 = dma.hbm_to_vmem [thread:$0]  %s2, 16, %s42, [#allocation6]
    $region13: #{text_recognition_head.1} parent=1 // pred_fallthru
      _
    // Predicated region
    $region14: #{text_recognition_head.1} parent=1 // pred_check
      _
    $region15: #{text_recognition_head.1} parent=1 // pred_check_branch
      %46 = sbr.rel (0) target = $region17
    $region16: #{text_recognition_head.1} parent=1 // pred_region
      %47 = dma.done [#allocation3], 128
    $region17: #{text_recognition_head.1} parent=1 // pred_fallthru
      _
    // Predicated region
    $region18: #{text_recognition_head.1} parent=1 // pred_check
      _
    $region19: #{text_recognition_head.1} parent=1 // pred_check_branch
      %49 = sbr.rel (0) target = $region21
    $region20: #{text_recognition_head.1} parent=1 // pred_region
      %50 = dma.done [#allocation6], 256
    $region21: #{text_recognition_head.1} parent=1 // pred_fallthru
      _
    // Predicated region
    $region22: #{text_recognition_head.1} parent=1 // pred_check
      _
    $region23: #{text_recognition_head.1} parent=1 // pred_check_branch
      %52 = sbr.rel (0) target = $region25
    $region24: #{text_recognition_head.1} parent=1 // pred_region
      %53 = dma.done [#allocation6], 16
    $region25: #{text_recognition_head.1} parent=1 // pred_fallthru
      _
    %v55 = vld [vmem:[#allocation2] sm:$0xf]
    %v56 = vld [vmem:[#allocation2 + $0x4] sm:$0xf]
    %v57 = vld [vmem:[#allocation5] sm:$0xf]
    %v58 = vld [vmem:[#allocation5 + $0x4] sm:$0xf]
    %v59 = vld [vmem:[#allocation5 + $0x8] sm:$0xf]
    %v60 = vld [vmem:[#allocation5 + $0xc] sm:$0xf]
    %v61 = vld [vmem:[#allocation7] sm:$0x1]
    %v63 = vlaneseq
    %v64 = vshrl.u32 %v63, 7
    %v65 = vsub.s32 0, %v64
    %v66 = vrot.slane %v61, %v65
    %v70 = vunpack.c.l.b16 %v55
    %v71 = vunpack.c.l.b16 %v56
    %v72 = vpack.c.b16 %v71, %v70
    %v77 = vunpack.c.l.b16 %v57
    %v78 = vunpack.c.l.b16 %v58
    %v79 = vunpack.c.l.b16 %v59
    %v80 = vunpack.c.l.b16 %v60
    %v81 = vpack.c.b16 %v78, %v77
    %v82 = vpack.c.b16 %v80, %v79
    %vm85 = vcmask 261120
    %v87 = vsel %vm85, %v72, 0
    %89 = vmatprep.subr.bf16.mxu0 0
    %90 = vmatpush1.bf16.msra.mxu0 %v81
    %91 = vmatprep.subr.bf16.mxu0 0
    %92 = vmatpush1.bf16.msra.mxu0 %v82
    %93 = vmatprep.subr.bf16.mxu0 0
    %94 = vmatpush1.bf16.msra.mxu0 0
    %95 = vmatprep.subr.bf16.mxu0 0
    %96 = vmatpush1.bf16.msra.mxu0 0
    %97 = vmatprep.subr.bf16.mxu0 0
    %98 = vmatpush1.bf16.msra.mxu0 0
    %99 = vmatprep.subr.bf16.mxu0 0
    %100 = vmatpush1.bf16.msra.mxu0 0
    %101 = vmatprep.subr.bf16.mxu0 0
    %102 = vmatpush1.bf16.msra.mxu0 0
    %103 = vmatprep.subr.bf16.mxu0 0
    %104 = vmatpush1.bf16.msra.mxu0 0
    %105 = vmatprep.subr.bf16.mxu0 0
    %106 = vmatpush1.bf16.msra.mxu0 0
    %107 = vmatprep.subr.bf16.mxu0 0
    %108 = vmatpush1.bf16.msra.mxu0 0
    %109 = vmatprep.subr.bf16.mxu0 0
    %110 = vmatpush1.bf16.msra.mxu0 0
    %111 = vmatprep.subr.bf16.mxu0 0
    %112 = vmatpush1.bf16.msra.mxu0 0
    %113 = vmatprep.subr.bf16.mxu0 0
    %114 = vmatpush1.bf16.msra.mxu0 0
    %115 = vmatprep.subr.bf16.mxu0 0
    %116 = vmatpush1.bf16.msra.mxu0 0
    %117 = vmatprep.subr.bf16.mxu0 0
    %118 = vmatpush1.bf16.msra.mxu0 0
    %119 = vmatprep.subr.bf16.mxu0 0
    %120 = vmatpush1.bf16.msra.mxu0 0
    %121 = vmatprep.mubr.bf16.mxu0 0
    %122 = vmatmul.mubr.bf16.gmra.mrb[0].mxu0 %v87
    %v123 = vpop.f32.mrb[0].mxu0
    %v124 = vadd.f32 %v66, %v123
    %v125 = vpop.f32.mrb[0].mxu0
    %v126 = vpop.f32.mrb[0].mxu0
    %v127 = vadd.f32 %v66, %v126
    %v128 = vpop.f32.mrb[0].mxu0
    %129 = vdwg.mxu0
    %130 = vmax.xlane.f32.xlu0 %v124
    %v131 = vpop.xlane.xlu0 %130
    %132 = vmax.xlane.f32.xlu0 %v127
    %v133 = vpop.xlane.xlu0 %132
    %v134 = vsub.f32 %v124, %v131
    %v135 = vsub.f32 %v127, %v133
    %v136 = vmul.f32 %v134, 1.442695
    %v137 = vpow.pop %v136
    %v138 = vmul.f32 %v135, 1.442695
    %v139 = vpow.pop %v138
    %140 = vadd.xlane.f32.xlu0 %v137
    %v141 = vpop.xlane.xlu0 %140
    %142 = vadd.xlane.f32.xlu0 %v139
    %v143 = vpop.xlane.xlu0 %142
    %v144 = vrcp.pop %v141
    %v145 = vrcp.pop %v143
    %v146 = vmul.f32 %v141, %v144
    %v147 = vmul.f32 %v143, %v145
    %v148 = vsub.f32 2.0, %v146
    %v149 = vsub.f32 2.0, %v147
    %v150 = vmul.f32 %v144, %v148
    %v151 = vmul.f32 %v145, %v149
    %v152 = vmul.f32 %v137, %v150
    %v153 = vmul.f32 %v139, %v151
    %154 = vst [vmem:[#allocation8] sm:$0xff] %v152
    %155 = vst [vmem:[#allocation8 + $0x8] sm:$0xff] %v153
    // Predicated region
    $region26: #{text_recognition_head.1} parent=1 // pred_check
      _
    $region27: #{text_recognition_head.1} parent=1 // pred_check_branch
      %157 = sbr.rel (0) target = $region29
    $region28: #{text_recognition_head.1} parent=1 // pred_region
      %s159 = ssub.s32 256, 256
      %160 = vsyncadd [#allocation4], %s159
      %s161 = sshll.u32 [#allocation8], 4
      %s162 = int_to_ptr.vmem [resolvable:$true] %s161
      %167 = dma.vmem_to_hbm [thread:$0]  %s162, 256, %s3, [#allocation4], 128, 128, 8
    $region29: #{text_recognition_head.1} parent=1 // pred_fallthru
      _
    // Predicated region
    $region30: #{text_recognition_head.1} parent=1 // pred_check
      _
    $region31: #{text_recognition_head.1} parent=1 // pred_check_branch
      %169 = sbr.rel (0) target = $region33
    $region32: #{text_recognition_head.1} parent=1 // pred_region
      %170 = dma.done [#allocation4], 256
    $region33: #{text_recognition_head.1} parent=1 // pred_fallthru
      _
    %171 = vsyncpa [#allocation3], 1
    %172 = vsyncpa [#allocation6], 1
    %173 = vsyncpa [#allocation4], 1

</llo_original>
